<compile_context>
chip_gen: v7x
topology: tpu7x:2x2x1
jax: 0.10.0
libtpu: 0.0.40
codegen_flags: <defaults>
</compile_context>

<pallas_src>
import functools

import jax
import jax.numpy as jnp
from jax.experimental import pallas as pl
from jax.experimental.pallas import tpu as pltpu

# Module hyper-parameters (from AEGen-V3.py).
HIDDEN_SIZE_1 = 400
HIDDEN_SIZE_2 = 169
LATENT_SIZE = 2


def _round_up(n, m):
    return ((n + m - 1) // m) * m


def _encoder2_kernel(x_ref, w1_ref, b1_ref, w2_ref, b2_ref, w3_ref, b3_ref, o_ref):
    """Whole MLP hot-path runs in VMEM for one batch tile. f32 accumulation."""
    x = x_ref[...]

    # Linear(input_size, hidden_size_1) + ReLU(inplace=True)
    h1 = jnp.dot(x, w1_ref[...], preferred_element_type=jnp.float32) + b1_ref[...]
    h1 = jnp.maximum(h1, 0.0).astype(w2_ref.dtype)

    # Linear(hidden_size_1, hidden_size_2) + ReLU(inplace=True)
    h2 = jnp.dot(h1, w2_ref[...], preferred_element_type=jnp.float32) + b2_ref[...]
    h2 = jnp.maximum(h2, 0.0).astype(w3_ref.dtype)

    # Linear(hidden_size_2, latent_size)
    out = jnp.dot(h2, w3_ref[...], preferred_element_type=jnp.float32) + b3_ref[...]
    o_ref[...] = out.astype(o_ref.dtype)


@functools.partial(jax.jit, static_argnames=("batch_tile", "compute_dtype"))
def encoder2_forward(x, w1, b1, w2, b2, w3, b3, *, batch_tile=None,
                     compute_dtype=jnp.bfloat16):
    """x: (B, input_size) f32.  Weights already transposed to (in, out)."""
    B, d_in = x.shape
    h1 = w1.shape[1]
    h2 = w2.shape[1]
    lat = w3.shape[1]

    # ---- Lane/sublane friendly padded sizes (all multiples of 128 on lanes). ----
    d_in_p = _round_up(d_in, 128)
    h1_p = _round_up(h1, 128)      # 400 -> 512
    h2_p = _round_up(h2, 128)      # 169 -> 256
    lat_p = _round_up(lat, 128)    # 2   -> 128  (lane-dense output block)

    # ---- Batch tile: large to amortize per-step overhead, grid >= 2 for v7x. ----
    if batch_tile is None:
        half = _round_up(max(B // 2, 1), 8)
        batch_tile = max(8, min(512, half))
    B_pad = _round_up(B, batch_tile)
    grid = (B_pad // batch_tile,)

    # ---- Zero-pad + cast operands (zeros are exact in bf16; ReLU keeps them 0). ----
    xp = jnp.zeros((B_pad, d_in_p), compute_dtype).at[:B, :d_in].set(
        x.astype(compute_dtype))

    w1p = jnp.zeros((d_in_p, h1_p), compute_dtype).at[:d_in, :h1].set(
        w1.astype(compute_dtype))
    w2p = jnp.zeros((h1_p, h2_p), compute_dtype).at[:h1, :h2].set(
        w2.astype(compute_dtype))
    w3p = jnp.zeros((h2_p, lat_p), compute_dtype).at[:h2, :lat].set(
        w3.astype(compute_dtype))

    # Biases stay f32 (added to the f32 MXU accumulator), carried as (1, out) rows.
    b1p = jnp.zeros((1, h1_p), jnp.float32).at[0, :h1].set(b1.astype(jnp.float32))
    b2p = jnp.zeros((1, h2_p), jnp.float32).at[0, :h2].set(b2.astype(jnp.float32))
    b3p = jnp.zeros((1, lat_p), jnp.float32).at[0, :lat].set(b3.astype(jnp.float32))

    full = lambda shape: pl.BlockSpec(shape, lambda i: (0, 0))

    out_padded = pl.pallas_call(
        _encoder2_kernel,
        out_shape=jax.ShapeDtypeStruct((B_pad, lat_p), jnp.float32),
        grid_spec=pl.GridSpec(
            grid=grid,
            in_specs=[
                pl.BlockSpec((batch_tile, d_in_p), lambda i: (i, 0)),  # x tile
                full((d_in_p, h1_p)),  # W1^T (VMEM-resident)
                full((1, h1_p)),       # b1
                full((h1_p, h2_p)),    # W2^T
                full((1, h2_p)),       # b2
                full((h2_p, lat_p)),   # W3^T
                full((1, lat_p)),      # b3
            ],
            out_specs=pl.BlockSpec((batch_tile, lat_p), lambda i: (i, 0)),
        ),
        compiler_params=pltpu.CompilerParams(
            dimension_semantics=("parallel",),
        ),
    )(xp, w1p, b1p, w2p, b2p, w3p, b3p)

    # Strip batch padding and the lane-dense latent padding.
    return out_padded[:B, :lat].astype(x.dtype)


def make_params(key, input_size, h1, h2, latent):
    """Deterministic synthetic parameters (PyTorch Linear shapes, then transposed)."""
    ks = jax.random.split(key, 6)
    # PyTorch stores W as (out, in); we build in that convention then transpose.
    w1_pt = jax.random.normal(ks[0], (h1, input_size), jnp.float32) * 0.05
    b1 = jax.random.normal(ks[1], (h1,), jnp.float32) * 0.05
    w2_pt = jax.random.normal(ks[2], (h2, h1), jnp.float32) * 0.05
    b2 = jax.random.normal(ks[3], (h2,), jnp.float32) * 0.05
    w3_pt = jax.random.normal(ks[4], (latent, h2), jnp.float32) * 0.05
    b3 = jax.random.normal(ks[5], (latent,), jnp.float32) * 0.05
    return (w1_pt.T, b1, w2_pt.T, b2, w3_pt.T, b3)


def reference_forward(x, w1, b1, w2, b2, w3, b3):
    h1 = jnp.maximum(x @ w1 + b1, 0.0)
    h2 = jnp.maximum(h1 @ w2 + b2, 0.0)
    return h2 @ w3 + b3


if __name__ == "__main__":
    key = jax.random.PRNGKey(0)
    k_x, k_p = jax.random.split(key)

    batch = 16
    input_size = 64  # small synthetic input size (constructor arg of Encoder2)

    x = jax.random.normal(k_x, (batch, input_size), jnp.float32)
    params = make_params(k_p, input_size, HIDDEN_SIZE_1, HIDDEN_SIZE_2, LATENT_SIZE)

    # Default path: bf16 operands, auto batch tile (grid >= 2).
    out = encoder2_forward(x, *params)
    out = jax.block_until_ready(out)

    ref = reference_forward(x, *params)
    assert out.shape == (batch, LATENT_SIZE)
    # bf16 operands (f32 accumulation) => loosen tolerance vs the f32 reference.
    assert jnp.allclose(out, ref, atol=3e-2, rtol=3e-2), "Pallas output mismatch vs reference"

    # Also check the full-precision path tightly.
    out_f32 = jax.block_until_ready(
        encoder2_forward(x, *params, compute_dtype=jnp.float32))
    assert jnp.allclose(out_f32, ref, atol=1e-4, rtol=1e-4), "f32 path mismatch vs reference"

    print("KERNEL_OK")
</pallas_src>

<mosaic_0001>
module attributes {stable_mosaic.version = 11 : i64} {
  func.func @_encoder2_kernel(%arg0: i32, %arg1: memref<8x128xbf16, #tpu.memory_space<vmem>>, %arg2: memref<128x512xbf16, #tpu.memory_space<vmem>>, %arg3: memref<1x512xf32, #tpu.memory_space<vmem>>, %arg4: memref<512x256xbf16, #tpu.memory_space<vmem>>, %arg5: memref<1x256xf32, #tpu.memory_space<vmem>>, %arg6: memref<256x128xbf16, #tpu.memory_space<vmem>>, %arg7: memref<1x128xf32, #tpu.memory_space<vmem>>, %arg8: memref<8x128xf32, #tpu.memory_space<vmem>>) attributes {dimension_semantics = [#tpu.dimension_semantics<parallel>], iteration_bounds = array<i64: 2>, scalar_prefetch = 0 : i64, scratch_operands = 0 : i64, tpu.core_type = #tpu.core_type<tc>, window_params = [{transform_indices = @transform_0, window_bounds = array<i64: 8, 128>}, {pipeline_mode = #tpu.pipeline_mode<synchronous>, transform_indices = @transform_1, window_bounds = array<i64: 128, 512>}, {pipeline_mode = #tpu.pipeline_mode<synchronous>, transform_indices = @transform_2, window_bounds = array<i64: 1, 512>}, {pipeline_mode = #tpu.pipeline_mode<synchronous>, transform_indices = @transform_3, window_bounds = array<i64: 512, 256>}, {pipeline_mode = #tpu.pipeline_mode<synchronous>, transform_indices = @transform_4, window_bounds = array<i64: 1, 256>}, {pipeline_mode = #tpu.pipeline_mode<synchronous>, transform_indices = @transform_5, window_bounds = array<i64: 256, 128>}, {pipeline_mode = #tpu.pipeline_mode<synchronous>, transform_indices = @transform_6, window_bounds = array<i64: 1, 128>}, {transform_indices = @transform_7, window_bounds = array<i64: 8, 128>}]} {
    %c0 = arith.constant 0 : index
    %c0_0 = arith.constant 0 : index
    %0 = vector.load %arg1[%c0, %c0_0] : memref<8x128xbf16, #tpu.memory_space<vmem>>, vector<8x128xbf16>
    %c0_1 = arith.constant 0 : index
    %c0_2 = arith.constant 0 : index
    %1 = vector.load %arg2[%c0_1, %c0_2] : memref<128x512xbf16, #tpu.memory_space<vmem>>, vector<128x512xbf16>
    %cst = arith.constant dense<0.000000e+00> : vector<8x512xf32>
    %2 = tpu.matmul %0, %1, %cst {dimension_numbers = #tpu.dot_dimension_numbers<[1], [0], [0], [1], [0, 0, 1, 1], [], []>} : vector<8x128xbf16>, vector<128x512xbf16>, vector<8x512xf32> -> vector<8x512xf32>
    %c0_3 = arith.constant 0 : index
    %c0_4 = arith.constant 0 : index
    %3 = vector.load %arg3[%c0_3, %c0_4] : memref<1x512xf32, #tpu.memory_space<vmem>>, vector<1x512xf32>
    %4 = vector.broadcast %3 : vector<1x512xf32> to vector<8x512xf32>
    %5 = arith.addf %2, %4 : vector<8x512xf32>
    %cst_5 = arith.constant 0.000000e+00 : f32
    %6 = vector.broadcast %cst_5 : f32 to vector<8x512xf32>
    %7 = arith.maximumf %5, %6 : vector<8x512xf32>
    %8 = arith.truncf %7 : vector<8x512xf32> to vector<8x512xbf16>
    %c0_6 = arith.constant 0 : index
    %c0_7 = arith.constant 0 : index
    %9 = vector.load %arg4[%c0_6, %c0_7] : memref<512x256xbf16, #tpu.memory_space<vmem>>, vector<512x256xbf16>
    %cst_8 = arith.constant dense<0.000000e+00> : vector<8x256xf32>
    %10 = tpu.matmul %8, %9, %cst_8 {dimension_numbers = #tpu.dot_dimension_numbers<[1], [0], [0], [1], [0, 0, 1, 1], [], []>} : vector<8x512xbf16>, vector<512x256xbf16>, vector<8x256xf32> -> vector<8x256xf32>
    %c0_9 = arith.constant 0 : index
    %c0_10 = arith.constant 0 : index
    %11 = vector.load %arg5[%c0_9, %c0_10] : memref<1x256xf32, #tpu.memory_space<vmem>>, vector<1x256xf32>
    %12 = vector.broadcast %11 : vector<1x256xf32> to vector<8x256xf32>
    %13 = arith.addf %10, %12 : vector<8x256xf32>
    %cst_11 = arith.constant 0.000000e+00 : f32
    %14 = vector.broadcast %cst_11 : f32 to vector<8x256xf32>
    %15 = arith.maximumf %13, %14 : vector<8x256xf32>
    %16 = arith.truncf %15 : vector<8x256xf32> to vector<8x256xbf16>
    %c0_12 = arith.constant 0 : index
    %c0_13 = arith.constant 0 : index
    %17 = vector.load %arg6[%c0_12, %c0_13] : memref<256x128xbf16, #tpu.memory_space<vmem>>, vector<256x128xbf16>
    %cst_14 = arith.constant dense<0.000000e+00> : vector<8x128xf32>
    %18 = tpu.matmul %16, %17, %cst_14 {dimension_numbers = #tpu.dot_dimension_numbers<[1], [0], [0], [1], [0, 0, 1, 1], [], []>} : vector<8x256xbf16>, vector<256x128xbf16>, vector<8x128xf32> -> vector<8x128xf32>
    %c0_15 = arith.constant 0 : index
    %c0_16 = arith.constant 0 : index
    %19 = vector.load %arg7[%c0_15, %c0_16] : memref<1x128xf32, #tpu.memory_space<vmem>>, vector<1x128xf32>
    %20 = vector.broadcast %19 : vector<1x128xf32> to vector<8x128xf32>
    %21 = arith.addf %18, %20 : vector<8x128xf32>
    %c0_17 = arith.constant 0 : index
    %c0_18 = arith.constant 0 : index
    %22 = vector.load %arg8[%c0_17, %c0_18] : memref<8x128xf32, #tpu.memory_space<vmem>>, vector<8x128xf32>
    tpu.vector_store %arg8[%c0_17, %c0_18], %21 {strides = array<i32>} : memref<8x128xf32, #tpu.memory_space<vmem>>, vector<8x128xf32>,
    return
  }
  func.func @transform_0(%arg0: i32) -> (i32, i32) {
    %c0_i32 = arith.constant 0 : i32
    %c0_i32_0 = arith.constant 0 : i32
    return %arg0, %c0_i32 : i32, i32
  }
  func.func @transform_1(%arg0: i32) -> (i32, i32) {
    %c0_i32 = arith.constant 0 : i32
    %c0_i32_0 = arith.constant 0 : i32
    %c0_i32_1 = arith.constant 0 : i32
    return %c0_i32, %c0_i32_0 : i32, i32
  }
  func.func @transform_2(%arg0: i32) -> (i32, i32) {
    %c0_i32 = arith.constant 0 : i32
    %c0_i32_0 = arith.constant 0 : i32
    %c0_i32_1 = arith.constant 0 : i32
    return %c0_i32, %c0_i32_0 : i32, i32
  }
  func.func @transform_3(%arg0: i32) -> (i32, i32) {
    %c0_i32 = arith.constant 0 : i32
    %c0_i32_0 = arith.constant 0 : i32
    %c0_i32_1 = arith.constant 0 : i32
    return %c0_i32, %c0_i32_0 : i32, i32
  }
  func.func @transform_4(%arg0: i32) -> (i32, i32) {
    %c0_i32 = arith.constant 0 : i32
    %c0_i32_0 = arith.constant 0 : i32
    %c0_i32_1 = arith.constant 0 : i32
    return %c0_i32, %c0_i32_0 : i32, i32
  }
  func.func @transform_5(%arg0: i32) -> (i32, i32) {
    %c0_i32 = arith.constant 0 : i32
    %c0_i32_0 = arith.constant 0 : i32
    %c0_i32_1 = arith.constant 0 : i32
    return %c0_i32, %c0_i32_0 : i32, i32
  }
  func.func @transform_6(%arg0: i32) -> (i32, i32) {
    %c0_i32 = arith.constant 0 : i32
    %c0_i32_0 = arith.constant 0 : i32
    %c0_i32_1 = arith.constant 0 : i32
    return %c0_i32, %c0_i32_0 : i32, i32
  }
  func.func @transform_7(%arg0: i32) -> (i32, i32) {
    %c0_i32 = arith.constant 0 : i32
    %c0_i32_0 = arith.constant 0 : i32
    return %arg0, %c0_i32 : i32, i32
  }
}

</mosaic_0001>

<llo_original>
// kernel: encoder2_forward.1
$region0: #{encoder2_forward.1}
  #allocation0 [shape = 'u32[]', space=smem, size = 0x4, offset = 0x4, fixed_abs, tag = 'smem constant byte address 0x4 - core index']
  #allocation1 [shape = 'u32[144,128]{1,0:T(1,128)}', space=vmem, size = 0x12000, scoped, tag = 'internal scratch']
  %s0 = inlined_call_operand.vmem [shape: bf16[16,128], index: 0, kind: input, shape index: {}]
  %s1 = inlined_call_operand.vmem [shape: bf16[128,512], index: 1, kind: input, shape index: {}]
  %s2 = inlined_call_operand.vmem [shape: f32[1,512], index: 2, kind: input, shape index: {}]
  %s3 = inlined_call_operand.vmem [shape: bf16[512,256], index: 3, kind: input, shape index: {}]
  %s4 = inlined_call_operand.vmem [shape: f32[1,256], index: 4, kind: input, shape index: {}]
  %s5 = inlined_call_operand.vmem [shape: bf16[256,128], index: 5, kind: input, shape index: {}]
  %s6 = inlined_call_operand.vmem [shape: f32[1,128], index: 6, kind: input, shape index: {}]
  %s7 = inlined_call_operand.vmem [shape: f32[16,128], index: 7, kind: output, shape index: {}]
  %s8 = sld [smem:[#allocation0]]
  $region61: #{encoder2_forward.1} parent=0
    _
  %s10 = ssub.s32 1, %s8
  %s11 = scalar_select 0, %s10, %s8
  loop: start=0, step=1, limit=4
  $region2: #{encoder2_forward.1} parent=0 // loop_pre_header
    _
  $region3: #{encoder2_forward.1} parent=0 // loop_header
    %s13 = sphi 0, %s17
    %p14 = scmp.ge.s32.totalorder %s13, 4
    %s23 = sphi 0, %s25
    %s26 = sphi 0, %s23
    %s27 = sphi 0, %s26
    %s43 = sphi 0, %s27
    %s47 = sphi 0, %s47
    %s49 = sphi 0, %s47
    %s50 = sphi 0, %s49
    %s64 = sphi 0, %s50
    %s68 = sphi 0, %s68
    %s70 = sphi 0, %s68
    %s71 = sphi 0, %s70
    %s85 = sphi 0, %s71
    %s89 = sphi 0, %s89
    %s91 = sphi 0, %s89
    %s92 = sphi 0, %s91
    %s106 = sphi 0, %s92
    %s110 = sphi 0, %s110
    %s112 = sphi 0, %s110
    %s113 = sphi 0, %s112
    %s127 = sphi 0, %s113
    %s131 = sphi 0, %s131
    %s133 = sphi 0, %s131
    %s134 = sphi 0, %s133
    %s148 = sphi 0, %s134
    %s152 = sphi 0, %s152
    %s154 = sphi 0, %s152
    %s155 = sphi 0, %s154
    %s169 = sphi 0, %s155
    %s175 = sphi 0, %s177
    %s178 = sphi 0, %s175
    %s179 = sphi 0, %s178
    %s195 = sphi 0, %s179
  $region4: #{encoder2_forward.1} parent=0 // loop_header_branch
    %16 = sbr.rel (%p14) target = $region8
  $region5: #{encoder2_forward.1} parent=0 // loop_body
    %s18 = ssub.s32 %s13, 1
    %s19 = ssub.s32 %s13, 2
    %s20 = sadd.s32 %s13, 1
    %s21 = ssub.s32 %s13, %s20
    %p22 = scmp.eq.s32.totalorder %s21, 0
    %s24 = sadd.s32 %s23, 1
    %s25 = scalar_select %p22, %s23, %s24
    %p28 = pneg %p22
    %p29 = scmp.eq.s32.totalorder %s13, 1
    %p30 = por %p28, %p29
    %p31 = scmp.ne.s32.totalorder %s23, %s26
    %p32 = scmp.eq.s32.totalorder %s13, 0
    %p33 = por %p31, %p32
    %p34 = scmp.ne.s32.totalorder %s23, %s26
    %p35 = scmp.eq.s32.totalorder %s18, 1
    %p36 = por %p34, %p35
    %p37 = scmp.ne.s32.totalorder %s26, %s27
    %p38 = scmp.eq.s32.totalorder %s18, 0
    %p39 = por %p37, %p38
    %p40 = scmp.ne.s32.totalorder %s26, %s27
    %p41 = scmp.eq.s32.totalorder %s19, 1
    %p42 = por %p40, %p41
    %p44 = scmp.ne.s32.totalorder %s27, %s43
    %p45 = scmp.eq.s32.totalorder %s19, 0
    %p46 = por %p44, %p45
    %s48 = sadd.s32 %s47, 1
    %p51 = scmp.eq.s32.totalorder %s13, 1
    %p52 = scmp.ne.s32.totalorder %s47, %s49
    %p53 = scmp.eq.s32.totalorder %s13, 0
    %p54 = por %p52, %p53
    %p55 = scmp.ne.s32.totalorder %s47, %s49
    %p56 = scmp.eq.s32.totalorder %s18, 1
    %p57 = por %p55, %p56
    %p58 = scmp.ne.s32.totalorder %s49, %s50
    %p59 = scmp.eq.s32.totalorder %s18, 0
    %p60 = por %p58, %p59
    %p61 = scmp.ne.s32.totalorder %s49, %s50
    %p62 = scmp.eq.s32.totalorder %s19, 1
    %p63 = por %p61, %p62
    %p65 = scmp.ne.s32.totalorder %s50, %s64
    %p66 = scmp.eq.s32.totalorder %s19, 0
    %p67 = por %p65, %p66
    %s69 = sadd.s32 %s68, 1
    %p72 = scmp.eq.s32.totalorder %s13, 1
    %p73 = scmp.ne.s32.totalorder %s68, %s70
    %p74 = scmp.eq.s32.totalorder %s13, 0
    %p75 = por %p73, %p74
    %p76 = scmp.ne.s32.totalorder %s68, %s70
    %p77 = scmp.eq.s32.totalorder %s18, 1
    %p78 = por %p76, %p77
    %p79 = scmp.ne.s32.totalorder %s70, %s71
    %p80 = scmp.eq.s32.totalorder %s18, 0
    %p81 = por %p79, %p80
    %p82 = scmp.ne.s32.totalorder %s70, %s71
    %p83 = scmp.eq.s32.totalorder %s19, 1
    %p84 = por %p82, %p83
    %p86 = scmp.ne.s32.totalorder %s71, %s85
    %p87 = scmp.eq.s32.totalorder %s19, 0
    %p88 = por %p86, %p87
    %s90 = sadd.s32 %s89, 1
    %p93 = scmp.eq.s32.totalorder %s13, 1
    %p94 = scmp.ne.s32.totalorder %s89, %s91
    %p95 = scmp.eq.s32.totalorder %s13, 0
    %p96 = por %p94, %p95
    %p97 = scmp.ne.s32.totalorder %s89, %s91
    %p98 = scmp.eq.s32.totalorder %s18, 1
    %p99 = por %p97, %p98
    %p100 = scmp.ne.s32.totalorder %s91, %s92
    %p101 = scmp.eq.s32.totalorder %s18, 0
    %p102 = por %p100, %p101
    %p103 = scmp.ne.s32.totalorder %s91, %s92
    %p104 = scmp.eq.s32.totalorder %s19, 1
    %p105 = por %p103, %p104
    %p107 = scmp.ne.s32.totalorder %s92, %s106
    %p108 = scmp.eq.s32.totalorder %s19, 0
    %p109 = por %p107, %p108
    %s111 = sadd.s32 %s110, 1
    %p114 = scmp.eq.s32.totalorder %s13, 1
    %p115 = scmp.ne.s32.totalorder %s110, %s112
    %p116 = scmp.eq.s32.totalorder %s13, 0
    %p117 = por %p115, %p116
    %p118 = scmp.ne.s32.totalorder %s110, %s112
    %p119 = scmp.eq.s32.totalorder %s18, 1
    %p120 = por %p118, %p119
    %p121 = scmp.ne.s32.totalorder %s112, %s113
    %p122 = scmp.eq.s32.totalorder %s18, 0
    %p123 = por %p121, %p122
    %p124 = scmp.ne.s32.totalorder %s112, %s113
    %p125 = scmp.eq.s32.totalorder %s19, 1
    %p126 = por %p124, %p125
    %p128 = scmp.ne.s32.totalorder %s113, %s127
    %p129 = scmp.eq.s32.totalorder %s19, 0
    %p130 = por %p128, %p129
    %s132 = sadd.s32 %s131, 1
    %p135 = scmp.eq.s32.totalorder %s13, 1
    %p136 = scmp.ne.s32.totalorder %s131, %s133
    %p137 = scmp.eq.s32.totalorder %s13, 0
    %p138 = por %p136, %p137
    %p139 = scmp.ne.s32.totalorder %s131, %s133
    %p140 = scmp.eq.s32.totalorder %s18, 1
    %p141 = por %p139, %p140
    %p142 = scmp.ne.s32.totalorder %s133, %s134
    %p143 = scmp.eq.s32.totalorder %s18, 0
    %p144 = por %p142, %p143
    %p145 = scmp.ne.s32.totalorder %s133, %s134
    %p146 = scmp.eq.s32.totalorder %s19, 1
    %p147 = por %p145, %p146
    %p149 = scmp.ne.s32.totalorder %s134, %s148
    %p150 = scmp.eq.s32.totalorder %s19, 0
    %p151 = por %p149, %p150
    %s153 = sadd.s32 %s152, 1
    %p156 = scmp.eq.s32.totalorder %s13, 1
    %p157 = scmp.ne.s32.totalorder %s152, %s154
    %p158 = scmp.eq.s32.totalorder %s13, 0
    %p159 = por %p157, %p158
    %p160 = scmp.ne.s32.totalorder %s152, %s154
    %p161 = scmp.eq.s32.totalorder %s18, 1
    %p162 = por %p160, %p161
    %p163 = scmp.ne.s32.totalorder %s154, %s155
    %p164 = scmp.eq.s32.totalorder %s18, 0
    %p165 = por %p163, %p164
    %p166 = scmp.ne.s32.totalorder %s154, %s155
    %p167 = scmp.eq.s32.totalorder %s19, 1
    %p168 = por %p166, %p167
    %p170 = scmp.ne.s32.totalorder %s155, %s169
    %p171 = scmp.eq.s32.totalorder %s19, 0
    %p172 = por %p170, %p171
    %s173 = ssub.s32 %s13, %s20
    %p174 = scmp.eq.s32.totalorder %s173, 0
    %s176 = sadd.s32 %s175, 1
    %s177 = scalar_select %p174, %s175, %s176
    %p180 = pneg %p174
    %p181 = scmp.eq.s32.totalorder %s13, 1
    %p182 = por %p180, %p181
    %p183 = scmp.ne.s32.totalorder %s175, %s178
    %p184 = scmp.eq.s32.totalorder %s13, 0
    %p185 = por %p183, %p184
    %p186 = scmp.ne.s32.totalorder %s175, %s178
    %p187 = scmp.eq.s32.totalorder %s18, 1
    %p188 = por %p186, %p187
    %p189 = scmp.ne.s32.totalorder %s178, %s179
    %p190 = scmp.eq.s32.totalorder %s18, 0
    %p191 = por %p189, %p190
    %p192 = scmp.ne.s32.totalorder %s178, %s179
    %p193 = scmp.eq.s32.totalorder %s19, 1
    %p194 = por %p192, %p193
    %p196 = scmp.ne.s32.totalorder %s179, %s195
    %p197 = scmp.eq.s32.totalorder %s19, 0
    %p198 = por %p196, %p197
    %p199 = scmp.le.s32.totalorder 1, %s13
    %p200 = scmp.lt.s32.totalorder %s13, 3
    %p201 = pnand %p199, %p200
    %p202 = pneg %p201
    // Predicated region
    $region9: #{encoder2_forward.1} parent=5 // pred_check
      _
    $region10: #{encoder2_forward.1} parent=5 // pred_check_branch
      %204 = sbr.rel (%p201) target = $region12
    $region11: #{encoder2_forward.1} parent=5 // pred_region
      %s205 = ssub.s32 %s13, 1
      // Predicated region
      $region13: #{encoder2_forward.1} parent=11 // pred_check
        %p206 = pneg %p60
      $region14: #{encoder2_forward.1} parent=11 // pred_check_branch
        %208 = sbr.rel (%p206) target = $region16
      $region15: #{encoder2_forward.1} parent=11 // pred_region
        _
      $region16: #{encoder2_forward.1} parent=11 // pred_fallthru
        _
      // Predicated region
      $region17: #{encoder2_forward.1} parent=11 // pred_check
        %p209 = pneg %p81
      $region18: #{encoder2_forward.1} parent=11 // pred_check_branch
        %211 = sbr.rel (%p209) target = $region20
      $region19: #{encoder2_forward.1} parent=11 // pred_region
        _
      $region20: #{encoder2_forward.1} parent=11 // pred_fallthru
        _
      // Predicated region
      $region21: #{encoder2_forward.1} parent=11 // pred_check
        %p212 = pneg %p102
      $region22: #{encoder2_forward.1} parent=11 // pred_check_branch
        %214 = sbr.rel (%p212) target = $region24
      $region23: #{encoder2_forward.1} parent=11 // pred_region
        _
      $region24: #{encoder2_forward.1} parent=11 // pred_fallthru
        _
      // Predicated region
      $region25: #{encoder2_forward.1} parent=11 // pred_check
        %p215 = pneg %p123
      $region26: #{encoder2_forward.1} parent=11 // pred_check_branch
        %217 = sbr.rel (%p215) target = $region28
      $region27: #{encoder2_forward.1} parent=11 // pred_region
        _
      $region28: #{encoder2_forward.1} parent=11 // pred_fallthru
        _
      // Predicated region
      $region29: #{encoder2_forward.1} parent=11 // pred_check
        %p218 = pneg %p144
      $region30: #{encoder2_forward.1} parent=11 // pred_check_branch
        %220 = sbr.rel (%p218) target = $region32
      $region31: #{encoder2_forward.1} parent=11 // pred_region
        _
      $region32: #{encoder2_forward.1} parent=11 // pred_fallthru
        _
      // Predicated region
      $region33: #{encoder2_forward.1} parent=11 // pred_check
        %p221 = pneg %p165
      $region34: #{encoder2_forward.1} parent=11 // pred_check_branch
        %223 = sbr.rel (%p221) target = $region36
      $region35: #{encoder2_forward.1} parent=11 // pred_region
        _
      $region36: #{encoder2_forward.1} parent=11 // pred_fallthru
        _
    $region12: #{encoder2_forward.1} parent=5 // pred_fallthru
      _
    %p224 = scmp.lt.s32.totalorder %s13, 2
    // Predicated region
    $region37: #{encoder2_forward.1} parent=5 // pred_check
      %p225 = pneg %p224
    $region38: #{encoder2_forward.1} parent=5 // pred_check_branch
      %227 = sbr.rel (%p225) target = $region40
    $region39: #{encoder2_forward.1} parent=5 // pred_region
      // Predicated region
      $region41: #{encoder2_forward.1} parent=39 // pred_check
        %p228 = pneg %p33
      $region42: #{encoder2_forward.1} parent=39 // pred_check_branch
        %230 = sbr.rel (%p228) target = $region44
      $region43: #{encoder2_forward.1} parent=39 // pred_region
        %p231 = scmp.lt.s32.totalorder %s13, 1
        %s232 = scalar_select %p231, %s13, 1
        %s233 = smul.addr %s232, 4
        %s234 = scalar_lea.vmem %s0, %s233
      $region44: #{encoder2_forward.1} parent=39 // pred_fallthru
        _
    $region40: #{encoder2_forward.1} parent=5 // pred_fallthru
      _
    %p235 = scmp.le.s32.totalorder 1, %s13
    %p236 = scmp.lt.s32.totalorder %s13, 3
    %p237 = pnand %p235, %p236
    %p238 = pneg %p237
    // Predicated region
    $region45: #{encoder2_forward.1} parent=5 // pred_check
      _
    $region46: #{encoder2_forward.1} parent=5 // pred_check_branch
      %240 = sbr.rel (%p237) target = $region48
    $region47: #{encoder2_forward.1} parent=5 // pred_region
      %s241 = ssub.s32 %s13, 1
      %p242 = scmp.lt.s32.totalorder %s18, 1
      %s243 = scalar_select %p242, %s18, 1
      %s244 = smul.addr %s243, 4
      %s245 = scalar_lea.vmem %s0, %s244
      %p246 = pneg %p39
      %p247 = pneg %p36
      %p248 = pneg %p60
      %p249 = pneg %p57
      %p250 = pneg %p81
      %p251 = pneg %p78
      %p252 = pneg %p102
      %p253 = pneg %p99
      %p254 = pneg %p123
      %p255 = pneg %p120
      %p256 = pneg %p144
      %p257 = pneg %p141
      %p258 = pneg %p165
      %p259 = pneg %p162
      %p260 = pneg %p191
      %p261 = pneg %p188
      %p262 = scmp.lt.s32.totalorder %s18, 1
      %s263 = scalar_select %p262, %s18, 1
      %s264 = smul.addr %s263, 8
      %s265 = scalar_lea.vmem %s7, %s264
      %p266 = scmp.lt.s32.totalorder %s18, 1
      %s267 = scalar_select %p266, %s18, 1
      %s268 = smul.addr %s267, 4
      %s269 = scalar_lea.vmem %s0, %s268
      %p270 = scmp.lt.s32.totalorder %s18, 1
      %s271 = scalar_select %p270, %s18, 1
      %s272 = smul.addr %s271, 8
      %s273 = scalar_lea.vmem %s7, %s272
      %v275 = vld [vmem:[%s269] sm:$0xf]
      %v276 = vld [vmem:[%s1] sm:$0xff]
      %v277 = vld [vmem:[%s1 + $0x8] sm:$0xff]
      %v278 = vld [vmem:[%s1 + $0x10] sm:$0xff]
      %v279 = vld [vmem:[%s1 + $0x18] sm:$0xff]
      %v280 = vld [vmem:[%s1 + $0x20] sm:$0xff]
      %v281 = vld [vmem:[%s1 + $0x28] sm:$0xff]
      %v282 = vld [vmem:[%s1 + $0x30] sm:$0xff]
      %v283 = vld [vmem:[%s1 + $0x38] sm:$0xff]
      %v284 = vld [vmem:[%s1 + $0x40] sm:$0xff]
      %v285 = vld [vmem:[%s1 + $0x48] sm:$0xff]
      %v286 = vld [vmem:[%s1 + $0x50] sm:$0xff]
      %v287 = vld [vmem:[%s1 + $0x58] sm:$0xff]
      %v288 = vld [vmem:[%s1 + $0x60] sm:$0xff]
      %v289 = vld [vmem:[%s1 + $0x68] sm:$0xff]
      %v290 = vld [vmem:[%s1 + $0x70] sm:$0xff]
      %v291 = vld [vmem:[%s1 + $0x78] sm:$0xff]
      %v292 = vld [vmem:[%s1 + $0x80] sm:$0xff]
      %v293 = vld [vmem:[%s1 + $0x88] sm:$0xff]
      %v294 = vld [vmem:[%s1 + $0x90] sm:$0xff]
      %v295 = vld [vmem:[%s1 + $0x98] sm:$0xff]
      %v296 = vld [vmem:[%s1 + $0xa0] sm:$0xff]
      %v297 = vld [vmem:[%s1 + $0xa8] sm:$0xff]
      %v298 = vld [vmem:[%s1 + $0xb0] sm:$0xff]
      %v299 = vld [vmem:[%s1 + $0xb8] sm:$0xff]
      %v300 = vld [vmem:[%s1 + $0xc0] sm:$0xff]
      %v301 = vld [vmem:[%s1 + $0xc8] sm:$0xff]
      %v302 = vld [vmem:[%s1 + $0xd0] sm:$0xff]
      %v303 = vld [vmem:[%s1 + $0xd8] sm:$0xff]
      %v304 = vld [vmem:[%s1 + $0xe0] sm:$0xff]
      %v305 = vld [vmem:[%s1 + $0xe8] sm:$0xff]
      %v306 = vld [vmem:[%s1 + $0xf0] sm:$0xff]
      %v307 = vld [vmem:[%s1 + $0xf8] sm:$0xff]
      %v308 = vld [vmem:[%s2] sm:$0xf]
      %v310 = vlaneseq
      %v311 = vshrl.u32 %v310, 7
      %v312 = vsub.s32 0, %v311
      %v313 = vrot.slane %v308, %v312
      %v314 = vlaneseq
      %v315 = vshrl.u32 %v314, 7
      %v316 = vsub.s32 1, %v315
      %v317 = vrot.slane %v308, %v316
      %v318 = vlaneseq
      %v319 = vshrl.u32 %v318, 7
      %v320 = vsub.s32 2, %v319
      %v321 = vrot.slane %v308, %v320
      %v322 = vlaneseq
      %v323 = vshrl.u32 %v322, 7
      %v324 = vsub.s32 3, %v323
      %v325 = vrot.slane %v308, %v324
      %v362 = vunpack.c.l.b16 %v276
      %v363 = vunpack.c.h.b16 %v276
      %v364 = vunpack.c.l.b16 %v277
      %v365 = vunpack.c.h.b16 %v277
      %v366 = vunpack.c.l.b16 %v278
      %v367 = vunpack.c.h.b16 %v278
      %v368 = vunpack.c.l.b16 %v279
      %v369 = vunpack.c.h.b16 %v279
      %v370 = vunpack.c.l.b16 %v280
      %v371 = vunpack.c.h.b16 %v280
      %v372 = vunpack.c.l.b16 %v281
      %v373 = vunpack.c.h.b16 %v281
      %v374 = vunpack.c.l.b16 %v282
      %v375 = vunpack.c.h.b16 %v282
      %v376 = vunpack.c.l.b16 %v283
      %v377 = vunpack.c.h.b16 %v283
      %v378 = vunpack.c.l.b16 %v284
      %v379 = vunpack.c.h.b16 %v284
      %v380 = vunpack.c.l.b16 %v285
      %v381 = vunpack.c.h.b16 %v285
      %v382 = vunpack.c.l.b16 %v286
      %v383 = vunpack.c.h.b16 %v286
      %v384 = vunpack.c.l.b16 %v287
      %v385 = vunpack.c.h.b16 %v287
      %v386 = vunpack.c.l.b16 %v288
      %v387 = vunpack.c.h.b16 %v288
      %v388 = vunpack.c.l.b16 %v289
      %v389 = vunpack.c.h.b16 %v289
      %v390 = vunpack.c.l.b16 %v290
      %v391 = vunpack.c.h.b16 %v290
      %v392 = vunpack.c.l.b16 %v291
      %v393 = vunpack.c.h.b16 %v291
      %v394 = vunpack.c.l.b16 %v292
      %v395 = vunpack.c.h.b16 %v292
      %v396 = vunpack.c.l.b16 %v293
      %v397 = vunpack.c.h.b16 %v293
      %v398 = vunpack.c.l.b16 %v294
      %v399 = vunpack.c.h.b16 %v294
      %v400 = vunpack.c.l.b16 %v295
      %v401 = vunpack.c.h.b16 %v295
      %v402 = vunpack.c.l.b16 %v296
      %v403 = vunpack.c.h.b16 %v296
      %v404 = vunpack.c.l.b16 %v297
      %v405 = vunpack.c.h.b16 %v297
      %v406 = vunpack.c.l.b16 %v298
      %v407 = vunpack.c.h.b16 %v298
      %v408 = vunpack.c.l.b16 %v299
      %v409 = vunpack.c.h.b16 %v299
      %v410 = vunpack.c.l.b16 %v300
      %v411 = vunpack.c.h.b16 %v300
      %v412 = vunpack.c.l.b16 %v301
      %v413 = vunpack.c.h.b16 %v301
      %v414 = vunpack.c.l.b16 %v302
      %v415 = vunpack.c.h.b16 %v302
      %v416 = vunpack.c.l.b16 %v303
      %v417 = vunpack.c.h.b16 %v303
      %v418 = vunpack.c.l.b16 %v304
      %v419 = vunpack.c.h.b16 %v304
      %v420 = vunpack.c.l.b16 %v305
      %v421 = vunpack.c.h.b16 %v305
      %v422 = vunpack.c.l.b16 %v306
      %v423 = vunpack.c.h.b16 %v306
      %v424 = vunpack.c.l.b16 %v307
      %v425 = vunpack.c.h.b16 %v307
      %v426 = vpack.c.b16 %v366, %v362
      %v427 = vpack.c.b16 %v367, %v363
      %v428 = vpack.c.b16 %v368, %v364
      %v429 = vpack.c.b16 %v369, %v365
      %v430 = vpack.c.b16 %v374, %v370
      %v431 = vpack.c.b16 %v375, %v371
      %v432 = vpack.c.b16 %v376, %v372
      %v433 = vpack.c.b16 %v377, %v373
      %v434 = vpack.c.b16 %v382, %v378
      %v435 = vpack.c.b16 %v383, %v379
      %v436 = vpack.c.b16 %v384, %v380
      %v437 = vpack.c.b16 %v385, %v381
      %v438 = vpack.c.b16 %v390, %v386
      %v439 = vpack.c.b16 %v391, %v387
      %v440 = vpack.c.b16 %v392, %v388
      %v441 = vpack.c.b16 %v393, %v389
      %v442 = vpack.c.b16 %v398, %v394
      %v443 = vpack.c.b16 %v399, %v395
      %v444 = vpack.c.b16 %v400, %v396
      %v445 = vpack.c.b16 %v401, %v397
      %v446 = vpack.c.b16 %v406, %v402
      %v447 = vpack.c.b16 %v407, %v403
      %v448 = vpack.c.b16 %v408, %v404
      %v449 = vpack.c.b16 %v409, %v405
      %v450 = vpack.c.b16 %v414, %v410
      %v451 = vpack.c.b16 %v415, %v411
      %v452 = vpack.c.b16 %v416, %v412
      %v453 = vpack.c.b16 %v417, %v413
      %v454 = vpack.c.b16 %v422, %v418
      %v455 = vpack.c.b16 %v423, %v419
      %v456 = vpack.c.b16 %v424, %v420
      %v457 = vpack.c.b16 %v425, %v421
      %490 = vmatprep.subr.bf16.mxu0 %v427
      %491 = vmatpush1.bf16.msra.mxu0 %v426
      %492 = vmatprep.subr.bf16.mxu0 %v431
      %493 = vmatpush1.bf16.msra.mxu0 %v430
      %494 = vmatprep.subr.bf16.mxu0 %v435
      %495 = vmatpush1.bf16.msra.mxu0 %v434
      %496 = vmatprep.subr.bf16.mxu0 %v439
      %497 = vmatpush1.bf16.msra.mxu0 %v438
      %498 = vmatprep.subr.bf16.mxu0 %v443
      %499 = vmatpush1.bf16.msra.mxu0 %v442
      %500 = vmatprep.subr.bf16.mxu0 %v447
      %501 = vmatpush1.bf16.msra.mxu0 %v446
      %502 = vmatprep.subr.bf16.mxu0 %v451
      %503 = vmatpush1.bf16.msra.mxu0 %v450
      %504 = vmatprep.subr.bf16.mxu0 %v455
      %505 = vmatpush1.bf16.msra.mxu0 %v454
      %506 = vmatprep.subr.bf16.mxu0 0
      %507 = vmatpush1.bf16.msra.mxu0 0
      %508 = vmatprep.subr.bf16.mxu0 0
      %509 = vmatpush1.bf16.msra.mxu0 0
      %510 = vmatprep.subr.bf16.mxu0 0
      %511 = vmatpush1.bf16.msra.mxu0 0
      %512 = vmatprep.subr.bf16.mxu0 0
      %513 = vmatpush1.bf16.msra.mxu0 0
      %514 = vmatprep.subr.bf16.mxu0 0
      %515 = vmatpush1.bf16.msra.mxu0 0
      %516 = vmatprep.subr.bf16.mxu0 0
      %517 = vmatpush1.bf16.msra.mxu0 0
      %518 = vmatprep.subr.bf16.mxu0 0
      %519 = vmatpush1.bf16.msra.mxu0 0
      %520 = vmatprep.subr.bf16.mxu0 0
      %521 = vmatpush1.bf16.msra.mxu0 0
      %522 = vmatprep.mubr.bf16.mxu0 0
      %523 = vmatmul.mubr.bf16.gmra.mrb[0].mxu0 %v275
      %v524 = vpop.f32.mrb[0].mxu0
      %v525 = vadd.f32 %v313, %v524
      %v526 = vpop.f32.mrb[0].mxu0
      %v527 = vadd.f32 %v317, %v526
      %v528 = vpop.f32.mrb[0].mxu0
      %v529 = vpop.f32.mrb[0].mxu0
      %530 = vdwg.mxu0
      %531 = vmatprep.subr.bf16.mxu0 %v429
      %532 = vmatpush1.bf16.msra.mxu0 %v428
      %533 = vmatprep.subr.bf16.mxu0 %v433
      %534 = vmatpush1.bf16.msra.mxu0 %v432
      %535 = vmatprep.subr.bf16.mxu0 %v437
      %536 = vmatpush1.bf16.msra.mxu0 %v436
      %537 = vmatprep.subr.bf16.mxu0 %v441
      %538 = vmatpush1.bf16.msra.mxu0 %v440
      %539 = vmatprep.subr.bf16.mxu0 %v445
      %540 = vmatpush1.bf16.msra.mxu0 %v444
      %541 = vmatprep.subr.bf16.mxu0 %v449
      %542 = vmatpush1.bf16.msra.mxu0 %v448
      %543 = vmatprep.subr.bf16.mxu0 %v453
      %544 = vmatpush1.bf16.msra.mxu0 %v452
      %545 = vmatprep.subr.bf16.mxu0 %v457
      %546 = vmatpush1.bf16.msra.mxu0 %v456
      %547 = vmatprep.subr.bf16.mxu0 0
      %548 = vmatpush1.bf16.msra.mxu0 0
      %549 = vmatprep.subr.bf16.mxu0 0
      %550 = vmatpush1.bf16.msra.mxu0 0
      %551 = vmatprep.subr.bf16.mxu0 0
      %552 = vmatpush1.bf16.msra.mxu0 0
      %553 = vmatprep.subr.bf16.mxu0 0
      %554 = vmatpush1.bf16.msra.mxu0 0
      %555 = vmatprep.subr.bf16.mxu0 0
      %556 = vmatpush1.bf16.msra.mxu0 0
      %557 = vmatprep.subr.bf16.mxu0 0
      %558 = vmatpush1.bf16.msra.mxu0 0
      %559 = vmatprep.subr.bf16.mxu0 0
      %560 = vmatpush1.bf16.msra.mxu0 0
      %561 = vmatprep.subr.bf16.mxu0 0
      %562 = vmatpush1.bf16.msra.mxu0 0
      %563 = vmatprep.mubr.bf16.mxu0 0
      %564 = vmatmul.mubr.bf16.gmra.mrb[0].mxu0 %v275
      %v565 = vpop.f32.mrb[0].mxu0
      %v566 = vadd.f32 %v321, %v565
      %v567 = vpop.f32.mrb[0].mxu0
      %v568 = vadd.f32 %v325, %v567
      %v569 = vpop.f32.mrb[0].mxu0
      %v570 = vpop.f32.mrb[0].mxu0
      %571 = vdwg.mxu0
      %v572 = vmax.f32 %v525, 0.0
      %v573 = vmax.f32 %v527, 0.0
      %v574 = vmax.f32 %v566, 0.0
      %v575 = vmax.f32 %v568, 0.0
      %v576 = vpack.c.bf16 %v572, %v572
      %v577 = vpack.c.bf16 %v573, %v573
      %v578 = vpack.c.bf16 %v574, %v574
      %v579 = vpack.c.bf16 %v575, %v575
      %v580 = vld [vmem:[%s3] sm:$0xff]
      %v581 = vld [vmem:[%s3 + $0x8] sm:$0xff]
      %v582 = vld [vmem:[%s3 + $0x10] sm:$0xff]
      %v583 = vld [vmem:[%s3 + $0x18] sm:$0xff]
      %v584 = vld [vmem:[%s3 + $0x20] sm:$0xff]
      %v585 = vld [vmem:[%s3 + $0x28] sm:$0xff]
      %v586 = vld [vmem:[%s3 + $0x30] sm:$0xff]
      %v587 = vld [vmem:[%s3 + $0x38] sm:$0xff]
      %v588 = vld [vmem:[%s3 + $0x40] sm:$0xff]
      %v589 = vld [vmem:[%s3 + $0x48] sm:$0xff]
      %v590 = vld [vmem:[%s3 + $0x50] sm:$0xff]
      %v591 = vld [vmem:[%s3 + $0x58] sm:$0xff]
      %v592 = vld [vmem:[%s3 + $0x60] sm:$0xff]
      %v593 = vld [vmem:[%s3 + $0x68] sm:$0xff]
      %v594 = vld [vmem:[%s3 + $0x70] sm:$0xff]
      %v595 = vld [vmem:[%s3 + $0x78] sm:$0xff]
      %v596 = vld [vmem:[%s3 + $0x80] sm:$0xff]
      %v597 = vld [vmem:[%s3 + $0x88] sm:$0xff]
      %v598 = vld [vmem:[%s3 + $0x90] sm:$0xff]
      %v599 = vld [vmem:[%s3 + $0x98] sm:$0xff]
      %v600 = vld [vmem:[%s3 + $0xa0] sm:$0xff]
      %v601 = vld [vmem:[%s3 + $0xa8] sm:$0xff]
      %v602 = vld [vmem:[%s3 + $0xb0] sm:$0xff]
      %v603 = vld [vmem:[%s3 + $0xb8] sm:$0xff]
      %v604 = vld [vmem:[%s3 + $0xc0] sm:$0xff]
      %v605 = vld [vmem:[%s3 + $0xc8] sm:$0xff]
      %v606 = vld [vmem:[%s3 + $0xd0] sm:$0xff]
      %v607 = vld [vmem:[%s3 + $0xd8] sm:$0xff]
      %v608 = vld [vmem:[%s3 + $0xe0] sm:$0xff]
      %v609 = vld [vmem:[%s3 + $0xe8] sm:$0xff]
      %v610 = vld [vmem:[%s3 + $0xf0] sm:$0xff]
      %v611 = vld [vmem:[%s3 + $0xf8] sm:$0xff]
      %v612 = vld [vmem:[%s3 + $0x100] sm:$0xff]
      %v613 = vld [vmem:[%s3 + $0x108] sm:$0xff]
      %v614 = vld [vmem:[%s3 + $0x110] sm:$0xff]
      %v615 = vld [vmem:[%s3 + $0x118] sm:$0xff]
      %v616 = vld [vmem:[%s3 + $0x120] sm:$0xff]
      %v617 = vld [vmem:[%s3 + $0x128] sm:$0xff]
      %v618 = vld [vmem:[%s3 + $0x130] sm:$0xff]
      %v619 = vld [vmem:[%s3 + $0x138] sm:$0xff]
      %v620 = vld [vmem:[%s3 + $0x140] sm:$0xff]
      %v621 = vld [vmem:[%s3 + $0x148] sm:$0xff]
      %v622 = vld [vmem:[%s3 + $0x150] sm:$0xff]
      %v623 = vld [vmem:[%s3 + $0x158] sm:$0xff]
      %v624 = vld [vmem:[%s3 + $0x160] sm:$0xff]
      %v625 = vld [vmem:[%s3 + $0x168] sm:$0xff]
      %v626 = vld [vmem:[%s3 + $0x170] sm:$0xff]
      %v627 = vld [vmem:[%s3 + $0x178] sm:$0xff]
      %v628 = vld [vmem:[%s3 + $0x180] sm:$0xff]
      %v629 = vld [vmem:[%s3 + $0x188] sm:$0xff]
      %v630 = vld [vmem:[%s3 + $0x190] sm:$0xff]
      %v631 = vld [vmem:[%s3 + $0x198] sm:$0xff]
      %v632 = vld [vmem:[%s3 + $0x1a0] sm:$0xff]
      %v633 = vld [vmem:[%s3 + $0x1a8] sm:$0xff]
      %v634 = vld [vmem:[%s3 + $0x1b0] sm:$0xff]
      %v635 = vld [vmem:[%s3 + $0x1b8] sm:$0xff]
      %v636 = vld [vmem:[%s3 + $0x1c0] sm:$0xff]
      %v637 = vld [vmem:[%s3 + $0x1c8] sm:$0xff]
      %v638 = vld [vmem:[%s3 + $0x1d0] sm:$0xff]
      %v639 = vld [vmem:[%s3 + $0x1d8] sm:$0xff]
      %v640 = vld [vmem:[%s3 + $0x1e0] sm:$0xff]
      %v641 = vld [vmem:[%s3 + $0x1e8] sm:$0xff]
      %v642 = vld [vmem:[%s3 + $0x1f0] sm:$0xff]
      %v643 = vld [vmem:[%s3 + $0x1f8] sm:$0xff]
      %v644 = vld [vmem:[%s4] sm:$0x3]
      %v646 = vlaneseq
      %v647 = vshrl.u32 %v646, 7
      %v648 = vsub.s32 0, %v647
      %v649 = vrot.slane %v644, %v648
      %v650 = vlaneseq
      %v651 = vshrl.u32 %v650, 7
      %v652 = vsub.s32 1, %v651
      %v653 = vrot.slane %v644, %v652
      %v720 = vunpack.c.l.b16 %v580
      %v721 = vunpack.c.h.b16 %v580
      %v722 = vunpack.c.l.b16 %v581
      %v723 = vunpack.c.h.b16 %v581
      %v724 = vunpack.c.l.b16 %v582
      %v725 = vunpack.c.h.b16 %v582
      %v726 = vunpack.c.l.b16 %v583
      %v727 = vunpack.c.h.b16 %v583
      %v728 = vunpack.c.l.b16 %v584
      %v729 = vunpack.c.h.b16 %v584
      %v730 = vunpack.c.l.b16 %v585
      %v731 = vunpack.c.h.b16 %v585
      %v732 = vunpack.c.l.b16 %v586
      %v733 = vunpack.c.h.b16 %v586
      %v734 = vunpack.c.l.b16 %v587
      %v735 = vunpack.c.h.b16 %v587
      %v736 = vunpack.c.l.b16 %v588
      %v737 = vunpack.c.h.b16 %v588
      %v738 = vunpack.c.l.b16 %v589
      %v739 = vunpack.c.h.b16 %v589
      %v740 = vunpack.c.l.b16 %v590
      %v741 = vunpack.c.h.b16 %v590
      %v742 = vunpack.c.l.b16 %v591
      %v743 = vunpack.c.h.b16 %v591
      %v744 = vunpack.c.l.b16 %v592
      %v745 = vunpack.c.h.b16 %v592
      %v746 = vunpack.c.l.b16 %v593
      %v747 = vunpack.c.h.b16 %v593
      %v748 = vunpack.c.l.b16 %v594
      %v749 = vunpack.c.h.b16 %v594
      %v750 = vunpack.c.l.b16 %v595
      %v751 = vunpack.c.h.b16 %v595
      %v752 = vunpack.c.l.b16 %v596
      %v753 = vunpack.c.h.b16 %v596
      %v754 = vunpack.c.l.b16 %v597
      %v755 = vunpack.c.h.b16 %v597
      %v756 = vunpack.c.l.b16 %v598
      %v757 = vunpack.c.h.b16 %v598
      %v758 = vunpack.c.l.b16 %v599
      %v759 = vunpack.c.h.b16 %v599
      %v760 = vunpack.c.l.b16 %v600
      %v761 = vunpack.c.h.b16 %v600
      %v762 = vunpack.c.l.b16 %v601
      %v763 = vunpack.c.h.b16 %v601
      %v764 = vunpack.c.l.b16 %v602
      %v765 = vunpack.c.h.b16 %v602
      %v766 = vunpack.c.l.b16 %v603
      %v767 = vunpack.c.h.b16 %v603
      %v768 = vunpack.c.l.b16 %v604
      %v769 = vunpack.c.h.b16 %v604
      %v770 = vunpack.c.l.b16 %v605
      %v771 = vunpack.c.h.b16 %v605
      %v772 = vunpack.c.l.b16 %v606
      %v773 = vunpack.c.h.b16 %v606
      %v774 = vunpack.c.l.b16 %v607
      %v775 = vunpack.c.h.b16 %v607
      %v776 = vunpack.c.l.b16 %v608
      %v777 = vunpack.c.h.b16 %v608
      %v778 = vunpack.c.l.b16 %v609
      %v779 = vunpack.c.h.b16 %v609
      %v780 = vunpack.c.l.b16 %v610
      %v781 = vunpack.c.h.b16 %v610
      %v782 = vunpack.c.l.b16 %v611
      %v783 = vunpack.c.h.b16 %v611
      %v784 = vunpack.c.l.b16 %v612
      %v785 = vunpack.c.h.b16 %v612
      %v786 = vunpack.c.l.b16 %v613
      %v787 = vunpack.c.h.b16 %v613
      %v788 = vunpack.c.l.b16 %v614
      %v789 = vunpack.c.h.b16 %v614
      %v790 = vunpack.c.l.b16 %v615
      %v791 = vunpack.c.h.b16 %v615
      %v792 = vunpack.c.l.b16 %v616
      %v793 = vunpack.c.h.b16 %v616
      %v794 = vunpack.c.l.b16 %v617
      %v795 = vunpack.c.h.b16 %v617
      %v796 = vunpack.c.l.b16 %v618
      %v797 = vunpack.c.h.b16 %v618
      %v798 = vunpack.c.l.b16 %v619
      %v799 = vunpack.c.h.b16 %v619
      %v800 = vunpack.c.l.b16 %v620
      %v801 = vunpack.c.h.b16 %v620
      %v802 = vunpack.c.l.b16 %v621
      %v803 = vunpack.c.h.b16 %v621
      %v804 = vunpack.c.l.b16 %v622
      %v805 = vunpack.c.h.b16 %v622
      %v806 = vunpack.c.l.b16 %v623
      %v807 = vunpack.c.h.b16 %v623
      %v808 = vunpack.c.l.b16 %v624
      %v809 = vunpack.c.h.b16 %v624
      %v810 = vunpack.c.l.b16 %v625
      %v811 = vunpack.c.h.b16 %v625
      %v812 = vunpack.c.l.b16 %v626
      %v813 = vunpack.c.h.b16 %v626
      %v814 = vunpack.c.l.b16 %v627
      %v815 = vunpack.c.h.b16 %v627
      %v816 = vunpack.c.l.b16 %v628
      %v817 = vunpack.c.h.b16 %v628
      %v818 = vunpack.c.l.b16 %v629
      %v819 = vunpack.c.h.b16 %v629
      %v820 = vunpack.c.l.b16 %v630
      %v821 = vunpack.c.h.b16 %v630
      %v822 = vunpack.c.l.b16 %v631
      %v823 = vunpack.c.h.b16 %v631
      %v824 = vunpack.c.l.b16 %v632
      %v825 = vunpack.c.h.b16 %v632
      %v826 = vunpack.c.l.b16 %v633
      %v827 = vunpack.c.h.b16 %v633
      %v828 = vunpack.c.l.b16 %v634
      %v829 = vunpack.c.h.b16 %v634
      %v830 = vunpack.c.l.b16 %v635
      %v831 = vunpack.c.h.b16 %v635
      %v832 = vunpack.c.l.b16 %v636
      %v833 = vunpack.c.h.b16 %v636
      %v834 = vunpack.c.l.b16 %v637
      %v835 = vunpack.c.h.b16 %v637
      %v836 = vunpack.c.l.b16 %v638
      %v837 = vunpack.c.h.b16 %v638
      %v838 = vunpack.c.l.b16 %v639
      %v839 = vunpack.c.h.b16 %v639
      %v840 = vunpack.c.l.b16 %v640
      %v841 = vunpack.c.h.b16 %v640
      %v842 = vunpack.c.l.b16 %v641
      %v843 = vunpack.c.h.b16 %v641
      %v844 = vunpack.c.l.b16 %v642
      %v845 = vunpack.c.h.b16 %v642
      %v846 = vunpack.c.l.b16 %v643
      %v847 = vunpack.c.h.b16 %v643
      %v848 = vpack.c.b16 %v722, %v720
      %v849 = vpack.c.b16 %v723, %v721
      %v850 = vpack.c.b16 %v726, %v724
      %v851 = vpack.c.b16 %v727, %v725
      %v852 = vpack.c.b16 %v730, %v728
      %v853 = vpack.c.b16 %v731, %v729
      %v854 = vpack.c.b16 %v734, %v732
      %v855 = vpack.c.b16 %v735, %v733
      %v856 = vpack.c.b16 %v738, %v736
      %v857 = vpack.c.b16 %v739, %v737
      %v858 = vpack.c.b16 %v742, %v740
      %v859 = vpack.c.b16 %v743, %v741
      %v860 = vpack.c.b16 %v746, %v744
      %v861 = vpack.c.b16 %v747, %v745
      %v862 = vpack.c.b16 %v750, %v748
      %v863 = vpack.c.b16 %v751, %v749
      %v864 = vpack.c.b16 %v754, %v752
      %v865 = vpack.c.b16 %v755, %v753
      %v866 = vpack.c.b16 %v758, %v756
      %v867 = vpack.c.b16 %v759, %v757
      %v868 = vpack.c.b16 %v762, %v760
      %v869 = vpack.c.b16 %v763, %v761
      %v870 = vpack.c.b16 %v766, %v764
      %v871 = vpack.c.b16 %v767, %v765
      %v872 = vpack.c.b16 %v770, %v768
      %v873 = vpack.c.b16 %v771, %v769
      %v874 = vpack.c.b16 %v774, %v772
      %v875 = vpack.c.b16 %v775, %v773
      %v876 = vpack.c.b16 %v778, %v776
      %v877 = vpack.c.b16 %v779, %v777
      %v878 = vpack.c.b16 %v782, %v780
      %v879 = vpack.c.b16 %v783, %v781
      %v880 = vpack.c.b16 %v786, %v784
      %v881 = vpack.c.b16 %v787, %v785
      %v882 = vpack.c.b16 %v790, %v788
      %v883 = vpack.c.b16 %v791, %v789
      %v884 = vpack.c.b16 %v794, %v792
      %v885 = vpack.c.b16 %v795, %v793
      %v886 = vpack.c.b16 %v798, %v796
      %v887 = vpack.c.b16 %v799, %v797
      %v888 = vpack.c.b16 %v802, %v800
      %v889 = vpack.c.b16 %v803, %v801
      %v890 = vpack.c.b16 %v806, %v804
      %v891 = vpack.c.b16 %v807, %v805
      %v892 = vpack.c.b16 %v810, %v808
      %v893 = vpack.c.b16 %v811, %v809
      %v894 = vpack.c.b16 %v814, %v812
      %v895 = vpack.c.b16 %v815, %v813
      %v896 = vpack.c.b16 %v818, %v816
      %v897 = vpack.c.b16 %v819, %v817
      %v898 = vpack.c.b16 %v822, %v820
      %v899 = vpack.c.b16 %v823, %v821
      %v900 = vpack.c.b16 %v826, %v824
      %v901 = vpack.c.b16 %v827, %v825
      %v902 = vpack.c.b16 %v830, %v828
      %v903 = vpack.c.b16 %v831, %v829
      %v904 = vpack.c.b16 %v834, %v832
      %v905 = vpack.c.b16 %v835, %v833
      %v906 = vpack.c.b16 %v838, %v836
      %v907 = vpack.c.b16 %v839, %v837
      %v908 = vpack.c.b16 %v842, %v840
      %v909 = vpack.c.b16 %v843, %v841
      %v910 = vpack.c.b16 %v846, %v844
      %v911 = vpack.c.b16 %v847, %v845
      %976 = vmatprep.subr.bf16.mxu0 %v849
      %977 = vmatpush1.bf16.msra.mxu0 %v848
      %978 = vmatprep.subr.bf16.mxu0 %v851
      %979 = vmatpush1.bf16.msra.mxu0 %v850
      %980 = vmatprep.subr.bf16.mxu0 %v853
      %981 = vmatpush1.bf16.msra.mxu0 %v852
      %982 = vmatprep.subr.bf16.mxu0 %v855
      %983 = vmatpush1.bf16.msra.mxu0 %v854
      %984 = vmatprep.subr.bf16.mxu0 %v857
      %985 = vmatpush1.bf16.msra.mxu0 %v856
      %986 = vmatprep.subr.bf16.mxu0 %v859
      %987 = vmatpush1.bf16.msra.mxu0 %v858
      %988 = vmatprep.subr.bf16.mxu0 %v861
      %989 = vmatpush1.bf16.msra.mxu0 %v860
      %990 = vmatprep.subr.bf16.mxu0 %v863
      %991 = vmatpush1.bf16.msra.mxu0 %v862
      %992 = vmatprep.subr.bf16.mxu0 %v865
      %993 = vmatpush1.bf16.msra.mxu0 %v864
      %994 = vmatprep.subr.bf16.mxu0 %v867
      %995 = vmatpush1.bf16.msra.mxu0 %v866
      %996 = vmatprep.subr.bf16.mxu0 %v869
      %997 = vmatpush1.bf16.msra.mxu0 %v868
      %998 = vmatprep.subr.bf16.mxu0 %v871
      %999 = vmatpush1.bf16.msra.mxu0 %v870
      %1000 = vmatprep.subr.bf16.mxu0 %v873
      %1001 = vmatpush1.bf16.msra.mxu0 %v872
      %1002 = vmatprep.subr.bf16.mxu0 %v875
      %1003 = vmatpush1.bf16.msra.mxu0 %v874
      %1004 = vmatprep.subr.bf16.mxu0 %v877
      %1005 = vmatpush1.bf16.msra.mxu0 %v876
      %1006 = vmatprep.subr.bf16.mxu0 %v879
      %1007 = vmatpush1.bf16.msra.mxu0 %v878
      %1008 = vmatprep.mubr.bf16.mxu0 %v577
      %1009 = vmatmul.mubr.bf16.gmra.mrb[0].mxu0 %v576
      %v1010 = vpop.f32.mrb[0].mxu0
      %v1011 = vadd.f32 %v649, %v1010
      %v1012 = vpop.f32.mrb[0].mxu0
      %v1013 = vadd.f32 %v653, %v1012
      %v1014 = vpop.f32.mrb[0].mxu0
      %v1015 = vpop.f32.mrb[0].mxu0
      %1016 = vdwg.mxu0
      %1017 = vmatprep.subr.bf16.mxu0 %v881
      %1018 = vmatpush1.bf16.msra.mxu0 %v880
      %1019 = vmatprep.subr.bf16.mxu0 %v883
      %1020 = vmatpush1.bf16.msra.mxu0 %v882
      %1021 = vmatprep.subr.bf16.mxu0 %v885
      %1022 = vmatpush1.bf16.msra.mxu0 %v884
      %1023 = vmatprep.subr.bf16.mxu0 %v887
      %1024 = vmatpush1.bf16.msra.mxu0 %v886
      %1025 = vmatprep.subr.bf16.mxu0 %v889
      %1026 = vmatpush1.bf16.msra.mxu0 %v888
      %1027 = vmatprep.subr.bf16.mxu0 %v891
      %1028 = vmatpush1.bf16.msra.mxu0 %v890
      %1029 = vmatprep.subr.bf16.mxu0 %v893
      %1030 = vmatpush1.bf16.msra.mxu0 %v892
      %1031 = vmatprep.subr.bf16.mxu0 %v895
      %1032 = vmatpush1.bf16.msra.mxu0 %v894
      %1033 = vmatprep.subr.bf16.mxu0 %v897
      %1034 = vmatpush1.bf16.msra.mxu0 %v896
      %1035 = vmatprep.subr.bf16.mxu0 %v899
      %1036 = vmatpush1.bf16.msra.mxu0 %v898
      %1037 = vmatprep.subr.bf16.mxu0 %v901
      %1038 = vmatpush1.bf16.msra.mxu0 %v900
      %1039 = vmatprep.subr.bf16.mxu0 %v903
      %1040 = vmatpush1.bf16.msra.mxu0 %v902
      %1041 = vmatprep.subr.bf16.mxu0 %v905
      %1042 = vmatpush1.bf16.msra.mxu0 %v904
      %1043 = vmatprep.subr.bf16.mxu0 %v907
      %1044 = vmatpush1.bf16.msra.mxu0 %v906
      %1045 = vmatprep.subr.bf16.mxu0 %v909
      %1046 = vmatpush1.bf16.msra.mxu0 %v908
      %1047 = vmatprep.subr.bf16.mxu0 %v911
      %1048 = vmatpush1.bf16.msra.mxu0 %v910
      %1049 = vmatprep.mubr.bf16.mxu0 %v579
      %1050 = vmatmul.mubr.bf16.gmra.mrb[0].mxu0 %v578
      %v1051 = vpop.f32.mrb[0].mxu0
      %v1052 = vadd.f32 %v1011, %v1051
      %v1053 = vpop.f32.mrb[0].mxu0
      %v1054 = vadd.f32 %v1013, %v1053
      %v1055 = vpop.f32.mrb[0].mxu0
      %v1056 = vpop.f32.mrb[0].mxu0
      %1057 = vdwg.mxu0
      %v1058 = vmax.f32 %v1052, 0.0
      %v1059 = vmax.f32 %v1054, 0.0
      %v1060 = vpack.c.bf16 %v1058, %v1058
      %v1061 = vpack.c.bf16 %v1059, %v1059
      %v1062 = vld [vmem:[%s5] sm:$0xf]
      %v1063 = vld [vmem:[%s5 + $0x4] sm:$0xf]
      %v1064 = vld [vmem:[%s5 + $0x8] sm:$0xf]
      %v1065 = vld [vmem:[%s5 + $0xc] sm:$0xf]
      %v1066 = vld [vmem:[%s5 + $0x10] sm:$0xf]
      %v1067 = vld [vmem:[%s5 + $0x14] sm:$0xf]
      %v1068 = vld [vmem:[%s5 + $0x18] sm:$0xf]
      %v1069 = vld [vmem:[%s5 + $0x1c] sm:$0xf]
      %v1070 = vld [vmem:[%s5 + $0x20] sm:$0xf]
      %v1071 = vld [vmem:[%s5 + $0x24] sm:$0xf]
      %v1072 = vld [vmem:[%s5 + $0x28] sm:$0xf]
      %v1073 = vld [vmem:[%s5 + $0x2c] sm:$0xf]
      %v1074 = vld [vmem:[%s5 + $0x30] sm:$0xf]
      %v1075 = vld [vmem:[%s5 + $0x34] sm:$0xf]
      %v1076 = vld [vmem:[%s5 + $0x38] sm:$0xf]
      %v1077 = vld [vmem:[%s5 + $0x3c] sm:$0xf]
      %v1078 = vld [vmem:[%s5 + $0x40] sm:$0xf]
      %v1079 = vld [vmem:[%s5 + $0x44] sm:$0xf]
      %v1080 = vld [vmem:[%s5 + $0x48] sm:$0xf]
      %v1081 = vld [vmem:[%s5 + $0x4c] sm:$0xf]
      %v1082 = vld [vmem:[%s5 + $0x50] sm:$0xf]
      %v1083 = vld [vmem:[%s5 + $0x54] sm:$0xf]
      %v1084 = vld [vmem:[%s5 + $0x58] sm:$0xf]
      %v1085 = vld [vmem:[%s5 + $0x5c] sm:$0xf]
      %v1086 = vld [vmem:[%s5 + $0x60] sm:$0xf]
      %v1087 = vld [vmem:[%s5 + $0x64] sm:$0xf]
      %v1088 = vld [vmem:[%s5 + $0x68] sm:$0xf]
      %v1089 = vld [vmem:[%s5 + $0x6c] sm:$0xf]
      %v1090 = vld [vmem:[%s5 + $0x70] sm:$0xf]
      %v1091 = vld [vmem:[%s5 + $0x74] sm:$0xf]
      %v1092 = vld [vmem:[%s5 + $0x78] sm:$0xf]
      %v1093 = vld [vmem:[%s5 + $0x7c] sm:$0xf]
      %v1094 = vld [vmem:[%s6] sm:$0x1]
      %v1096 = vlaneseq
      %v1097 = vshrl.u32 %v1096, 7
      %v1098 = vsub.s32 0, %v1097
      %v1099 = vrot.slane %v1094, %v1098
      %v1133 = vunpack.c.l.b16 %v1062
      %v1134 = vunpack.c.l.b16 %v1063
      %v1135 = vunpack.c.l.b16 %v1064
      %v1136 = vunpack.c.l.b16 %v1065
      %v1137 = vunpack.c.l.b16 %v1066
      %v1138 = vunpack.c.l.b16 %v1067
      %v1139 = vunpack.c.l.b16 %v1068
      %v1140 = vunpack.c.l.b16 %v1069
      %v1141 = vunpack.c.l.b16 %v1070
      %v1142 = vunpack.c.l.b16 %v1071
      %v1143 = vunpack.c.l.b16 %v1072
      %v1144 = vunpack.c.l.b16 %v1073
      %v1145 = vunpack.c.l.b16 %v1074
      %v1146 = vunpack.c.l.b16 %v1075
      %v1147 = vunpack.c.l.b16 %v1076
      %v1148 = vunpack.c.l.b16 %v1077
      %v1149 = vunpack.c.l.b16 %v1078
      %v1150 = vunpack.c.l.b16 %v1079
      %v1151 = vunpack.c.l.b16 %v1080
      %v1152 = vunpack.c.l.b16 %v1081
      %v1153 = vunpack.c.l.b16 %v1082
      %v1154 = vunpack.c.l.b16 %v1083
      %v1155 = vunpack.c.l.b16 %v1084
      %v1156 = vunpack.c.l.b16 %v1085
      %v1157 = vunpack.c.l.b16 %v1086
      %v1158 = vunpack.c.l.b16 %v1087
      %v1159 = vunpack.c.l.b16 %v1088
      %v1160 = vunpack.c.l.b16 %v1089
      %v1161 = vunpack.c.l.b16 %v1090
      %v1162 = vunpack.c.l.b16 %v1091
      %v1163 = vunpack.c.l.b16 %v1092
      %v1164 = vunpack.c.l.b16 %v1093
      %v1165 = vpack.c.b16 %v1134, %v1133
      %v1166 = vpack.c.b16 %v1136, %v1135
      %v1167 = vpack.c.b16 %v1138, %v1137
      %v1168 = vpack.c.b16 %v1140, %v1139
      %v1169 = vpack.c.b16 %v1142, %v1141
      %v1170 = vpack.c.b16 %v1144, %v1143
      %v1171 = vpack.c.b16 %v1146, %v1145
      %v1172 = vpack.c.b16 %v1148, %v1147
      %v1173 = vpack.c.b16 %v1150, %v1149
      %v1174 = vpack.c.b16 %v1152, %v1151
      %v1175 = vpack.c.b16 %v1154, %v1153
      %v1176 = vpack.c.b16 %v1156, %v1155
      %v1177 = vpack.c.b16 %v1158, %v1157
      %v1178 = vpack.c.b16 %v1160, %v1159
      %v1179 = vpack.c.b16 %v1162, %v1161
      %v1180 = vpack.c.b16 %v1164, %v1163
      %1197 = vmatprep.subr.bf16.mxu0 0
      %1198 = vmatpush1.bf16.msra.mxu0 %v1165
      %1199 = vmatprep.subr.bf16.mxu0 0
      %1200 = vmatpush1.bf16.msra.mxu0 %v1166
      %1201 = vmatprep.subr.bf16.mxu0 0
      %1202 = vmatpush1.bf16.msra.mxu0 %v1167
      %1203 = vmatprep.subr.bf16.mxu0 0
      %1204 = vmatpush1.bf16.msra.mxu0 %v1168
      %1205 = vmatprep.subr.bf16.mxu0 0
      %1206 = vmatpush1.bf16.msra.mxu0 %v1169
      %1207 = vmatprep.subr.bf16.mxu0 0
      %1208 = vmatpush1.bf16.msra.mxu0 %v1170
      %1209 = vmatprep.subr.bf16.mxu0 0
      %1210 = vmatpush1.bf16.msra.mxu0 %v1171
      %1211 = vmatprep.subr.bf16.mxu0 0
      %1212 = vmatpush1.bf16.msra.mxu0 %v1172
      %1213 = vmatprep.subr.bf16.mxu0 0
      %1214 = vmatpush1.bf16.msra.mxu0 %v1173
      %1215 = vmatprep.subr.bf16.mxu0 0
      %1216 = vmatpush1.bf16.msra.mxu0 %v1174
      %1217 = vmatprep.subr.bf16.mxu0 0
      %1218 = vmatpush1.bf16.msra.mxu0 %v1175
      %1219 = vmatprep.subr.bf16.mxu0 0
      %1220 = vmatpush1.bf16.msra.mxu0 %v1176
      %1221 = vmatprep.subr.bf16.mxu0 0
      %1222 = vmatpush1.bf16.msra.mxu0 %v1177
      %1223 = vmatprep.subr.bf16.mxu0 0
      %1224 = vmatpush1.bf16.msra.mxu0 %v1178
      %1225 = vmatprep.subr.bf16.mxu0 0
      %1226 = vmatpush1.bf16.msra.mxu0 %v1179
      %1227 = vmatprep.subr.bf16.mxu0 0
      %1228 = vmatpush1.bf16.msra.mxu0 %v1180
      %1229 = vmatprep.mubr.bf16.mxu0 %v1061
      %1230 = vmatmul.mubr.bf16.gmra.mrb[0].mxu0 %v1060
      %v1231 = vpop.f32.mrb[0].mxu0
      %v1232 = vadd.f32 %v1099, %v1231
      %v1233 = vpop.f32.mrb[0].mxu0
      %v1234 = vpop.f32.mrb[0].mxu0
      %v1235 = vpop.f32.mrb[0].mxu0
      %1236 = vdwg.mxu0
      %1237 = vst [vmem:[%s273] sm:$0xff] %v1232
      %p1238 = scmp.lt.s32.totalorder %s18, 1
      %s1239 = scalar_select %p1238, %s18, 1
      %s1240 = smul.addr %s1239, 8
      %s1241 = scalar_lea.vmem %s7, %s1240
      // Predicated region
      $region49: #{encoder2_forward.1} parent=47 // pred_check
        %p1242 = pneg %p188
      $region50: #{encoder2_forward.1} parent=47 // pred_check_branch
        %1244 = sbr.rel (%p1242) target = $region52
      $region51: #{encoder2_forward.1} parent=47 // pred_region
        _
      $region52: #{encoder2_forward.1} parent=47 // pred_fallthru
        _
    $region48: #{encoder2_forward.1} parent=5 // pred_fallthru
      _
    %p1245 = scmp.le.s32.totalorder 2, %s13
    // Predicated region
    $region53: #{encoder2_forward.1} parent=5 // pred_check
      %p1246 = pneg %p1245
    $region54: #{encoder2_forward.1} parent=5 // pred_check_branch
      %1248 = sbr.rel (%p1246) target = $region56
    $region55: #{encoder2_forward.1} parent=5 // pred_region
      %s1249 = ssub.s32 %s13, 2
      // Predicated region
      $region57: #{encoder2_forward.1} parent=55 // pred_check
        %p1250 = pneg %p194
      $region58: #{encoder2_forward.1} parent=55 // pred_check_branch
        %1252 = sbr.rel (%p1250) target = $region60
      $region59: #{encoder2_forward.1} parent=55 // pred_region
        %p1253 = scmp.lt.s32.totalorder %s19, 1
        %s1254 = scalar_select %p1253, %s19, 1
        %s1255 = smul.addr %s1254, 8
        %s1256 = scalar_lea.vmem %s7, %s1255
      $region60: #{encoder2_forward.1} parent=55 // pred_fallthru
        _
    $region56: #{encoder2_forward.1} parent=5 // pred_fallthru
      _
  $region6: #{encoder2_forward.1} parent=0 // loop_footer
    %s17 = sadd.s32 1, %s13
  $region7: #{encoder2_forward.1} parent=0 // loop_footer_branch
    %12 = sbr.rel target = $region3
  $region8: #{encoder2_forward.1} parent=0 // loop_exit
    _

</llo_original>
